<compile_context>
chip_gen: v7x
topology: tpu7x:2x2x1
jax: 0.10.0
libtpu: 0.0.40
codegen_flags: <defaults>
</compile_context>

<pallas_src>
import jax
import jax.numpy as jnp
from jax.experimental import pallas as pl
from jax.experimental.pallas import tpu as pltpu

Z_DIM = 64
HIDDEN = 256
IMG_DIM = 784                       # 28*28 MNIST image (standard for this GAN)
IMG_DIM_PAD = 896                   # 7 * 128 -> lane-dense output stores
TB_MAX = 256                        # batch tile (full MXU width on v6e/v7x)


def _round_up(n, m):
    return ((n + m - 1) // m) * m


def generator_kernel(x_ref, w1_ref, b1_ref, w2_ref, b2_ref, o_ref):
    # ---- fused MLP: matmul -> bias -> LeakyReLU -> matmul -> bias -> tanh ----
    # Linear 1 on the MXU: bf16 x bf16 inputs, f32 accumulation.
    h = jnp.dot(x_ref[...], w1_ref[...], preferred_element_type=jnp.float32)
    h = h + b1_ref[...]                       # (1, HIDDEN) broadcasts over batch

    # LeakyReLU(0.2) in f32 (VPU).
    h = jnp.where(h > 0, h, 0.2 * h)

    # Linear 2 on the MXU: cast activations to bf16 for native MXU rate.
    y = jnp.dot(h.astype(jnp.bfloat16), w2_ref[...],
                preferred_element_type=jnp.float32)
    y = y + b2_ref[...]                       # (1, IMG_DIM_PAD)

    # Tanh epilogue (EUP) in f32.
    o_ref[...] = jnp.tanh(y).astype(o_ref.dtype)


def generator_forward(x, w1, b1, w2, b2):
    """x: (B, Z_DIM) f32 latent noise. w1:(Z_DIM,HIDDEN) b1:(1,HIDDEN)
    w2:(HIDDEN,IMG_DIM) b2:(1,IMG_DIM), all f32 (PyTorch layout transposed so
    the kernel computes y = x @ W + b). Returns (B, IMG_DIM) f32."""
    B = x.shape[0]

    # Batch tile: multiple of 16 (bf16 sublane packing); full MXU width when possible.
    TB = min(TB_MAX, _round_up(B, 16))
    B_pad = _round_up(B, TB)

    # Prepare operands: bf16 weights/inputs, lane-pad the output feature dim.
    x_p = x
    if B_pad != B:
        x_p = jnp.pad(x_p, ((0, B_pad - B), (0, 0)))
    x_bf16 = x_p.astype(jnp.bfloat16)
    w1_bf16 = w1.astype(jnp.bfloat16)
    w2_bf16 = jnp.pad(w2, ((0, 0), (0, IMG_DIM_PAD - IMG_DIM))).astype(jnp.bfloat16)
    b2_pad = jnp.pad(b2, ((0, 0), (0, IMG_DIM_PAD - IMG_DIM)))

    grid = (B_pad // TB,)

    out_padded = pl.pallas_call(
        generator_kernel,
        out_shape=jax.ShapeDtypeStruct((B_pad, IMG_DIM_PAD), jnp.float32),
        grid_spec=pl.GridSpec(
            grid=grid,
            in_specs=[
                pl.BlockSpec((TB, Z_DIM), lambda i: (i, 0)),          # x tile
                pl.BlockSpec((Z_DIM, HIDDEN), lambda i: (0, 0)),      # w1 (resident)
                pl.BlockSpec((1, HIDDEN), lambda i: (0, 0)),          # b1 (resident)
                pl.BlockSpec((HIDDEN, IMG_DIM_PAD), lambda i: (0, 0)),  # w2 (resident)
                pl.BlockSpec((1, IMG_DIM_PAD), lambda i: (0, 0)),     # b2 (resident)
            ],
            out_specs=pl.BlockSpec((TB, IMG_DIM_PAD), lambda i: (i, 0)),
        ),
        compiler_params=pltpu.CompilerParams(
            dimension_semantics=("parallel",),   # v7x: shard batch tiles over 2 TCs
        ),
    )(x_bf16, w1_bf16, b1, w2_bf16, b2_pad)

    # Drop batch padding and lane padding.
    return out_padded[:B, :IMG_DIM]


def init_params(key):
    """Deterministic init matching PyTorch nn.Linear default:
    U(-1/sqrt(fan_in), 1/sqrt(fan_in)) for weights and biases."""
    k1, k2, k3, k4 = jax.random.split(key, 4)
    bound1 = 1.0 / jnp.sqrt(Z_DIM)
    bound2 = 1.0 / jnp.sqrt(HIDDEN)
    w1 = jax.random.uniform(k1, (Z_DIM, HIDDEN), jnp.float32, -bound1, bound1)
    b1 = jax.random.uniform(k2, (1, HIDDEN), jnp.float32, -bound1, bound1)
    w2 = jax.random.uniform(k3, (HIDDEN, IMG_DIM), jnp.float32, -bound2, bound2)
    b2 = jax.random.uniform(k4, (1, IMG_DIM), jnp.float32, -bound2, bound2)
    return w1, b1, w2, b2


if __name__ == "__main__":
    key = jax.random.PRNGKey(0)
    k_params, k_x = jax.random.split(key)

    w1, b1, w2, b2 = init_params(k_params)

    batch = 8
    x = jax.random.normal(k_x, (batch, Z_DIM), jnp.float32)  # latent noise z

    out = generator_forward(x, w1, b1, w2, b2)
    out = jax.block_until_ready(out)

    # Reference 1: full-f32 math (loose tolerance — kernel uses bf16 weights).
    h_f32 = x @ w1 + b1
    h_f32 = jnp.where(h_f32 > 0, h_f32, 0.2 * h_f32)
    y_f32 = jnp.tanh(h_f32 @ w2 + b2)

    # Reference 2: same bf16-weight / f32-accumulate recipe (tight tolerance).
    h_bf = jnp.dot(x.astype(jnp.bfloat16), w1.astype(jnp.bfloat16),
                   preferred_element_type=jnp.float32) + b1
    h_bf = jnp.where(h_bf > 0, h_bf, 0.2 * h_bf)
    y_bf = jnp.tanh(jnp.dot(h_bf.astype(jnp.bfloat16), w2.astype(jnp.bfloat16),
                            preferred_element_type=jnp.float32) + b2)

    assert out.shape == (batch, IMG_DIM)
    assert jnp.allclose(out, y_bf, atol=2e-3, rtol=1e-3), \
        float(jnp.max(jnp.abs(out - y_bf)))
    assert jnp.allclose(out, y_f32, atol=3e-2, rtol=0.0), \
        float(jnp.max(jnp.abs(out - y_f32)))

    print("KERNEL_OK")
</pallas_src>

<mosaic_0001>
module attributes {stable_mosaic.version = 11 : i64} {
  func.func @generator_kernel(%arg0: i32, %arg1: memref<16x64xbf16, #tpu.memory_space<vmem>>, %arg2: memref<64x256xbf16, #tpu.memory_space<vmem>>, %arg3: memref<1x256xf32, #tpu.memory_space<vmem>>, %arg4: memref<256x896xbf16, #tpu.memory_space<vmem>>, %arg5: memref<1x896xf32, #tpu.memory_space<vmem>>, %arg6: memref<16x896xf32, #tpu.memory_space<vmem>>) attributes {dimension_semantics = [#tpu.dimension_semantics<parallel>], iteration_bounds = array<i64: 1>, scalar_prefetch = 0 : i64, scratch_operands = 0 : i64, tpu.core_type = #tpu.core_type<tc>, window_params = [{transform_indices = @transform_0, window_bounds = array<i64: 16, 64>}, {pipeline_mode = #tpu.pipeline_mode<synchronous>, transform_indices = @transform_1, window_bounds = array<i64: 64, 256>}, {pipeline_mode = #tpu.pipeline_mode<synchronous>, transform_indices = @transform_2, window_bounds = array<i64: 1, 256>}, {pipeline_mode = #tpu.pipeline_mode<synchronous>, transform_indices = @transform_3, window_bounds = array<i64: 256, 896>}, {pipeline_mode = #tpu.pipeline_mode<synchronous>, transform_indices = @transform_4, window_bounds = array<i64: 1, 896>}, {transform_indices = @transform_5, window_bounds = array<i64: 16, 896>}]} {
    %c0 = arith.constant 0 : index
    %c0_0 = arith.constant 0 : index
    %0 = vector.load %arg1[%c0, %c0_0] : memref<16x64xbf16, #tpu.memory_space<vmem>>, vector<16x64xbf16>
    %c0_1 = arith.constant 0 : index
    %c0_2 = arith.constant 0 : index
    %1 = vector.load %arg2[%c0_1, %c0_2] : memref<64x256xbf16, #tpu.memory_space<vmem>>, vector<64x256xbf16>
    %cst = arith.constant dense<0.000000e+00> : vector<16x256xf32>
    %2 = tpu.matmul %0, %1, %cst {dimension_numbers = #tpu.dot_dimension_numbers<[1], [0], [0], [1], [0, 0, 1, 1], [], []>} : vector<16x64xbf16>, vector<64x256xbf16>, vector<16x256xf32> -> vector<16x256xf32>
    %c0_3 = arith.constant 0 : index
    %c0_4 = arith.constant 0 : index
    %3 = vector.load %arg3[%c0_3, %c0_4] : memref<1x256xf32, #tpu.memory_space<vmem>>, vector<1x256xf32>
    %4 = vector.broadcast %3 : vector<1x256xf32> to vector<16x256xf32>
    %5 = arith.addf %2, %4 : vector<16x256xf32>
    %cst_5 = arith.constant 0.000000e+00 : f32
    %6 = vector.broadcast %cst_5 : f32 to vector<16x256xf32>
    %7 = arith.cmpf ogt, %5, %6 : vector<16x256xf32>
    %cst_6 = arith.constant 2.000000e-01 : f32
    %8 = vector.broadcast %cst_6 : f32 to vector<16x256xf32>
    %9 = arith.mulf %8, %5 : vector<16x256xf32>
    %10 = arith.select %7, %5, %9 : vector<16x256xi1>, vector<16x256xf32>
    %11 = arith.truncf %10 : vector<16x256xf32> to vector<16x256xbf16>
    %c0_7 = arith.constant 0 : index
    %c0_8 = arith.constant 0 : index
    %12 = vector.load %arg4[%c0_7, %c0_8] : memref<256x896xbf16, #tpu.memory_space<vmem>>, vector<256x896xbf16>
    %cst_9 = arith.constant dense<0.000000e+00> : vector<16x896xf32>
    %13 = tpu.matmul %11, %12, %cst_9 {dimension_numbers = #tpu.dot_dimension_numbers<[1], [0], [0], [1], [0, 0, 1, 1], [], []>} : vector<16x256xbf16>, vector<256x896xbf16>, vector<16x896xf32> -> vector<16x896xf32>
    %c0_10 = arith.constant 0 : index
    %c0_11 = arith.constant 0 : index
    %14 = vector.load %arg5[%c0_10, %c0_11] : memref<1x896xf32, #tpu.memory_space<vmem>>, vector<1x896xf32>
    %15 = vector.broadcast %14 : vector<1x896xf32> to vector<16x896xf32>
    %16 = arith.addf %13, %15 : vector<16x896xf32>
    %17 = math.tanh %16 : vector<16x896xf32>
    %c0_12 = arith.constant 0 : index
    %c0_13 = arith.constant 0 : index
    %18 = vector.load %arg6[%c0_12, %c0_13] : memref<16x896xf32, #tpu.memory_space<vmem>>, vector<16x896xf32>
    tpu.vector_store %arg6[%c0_12, %c0_13], %17 {strides = array<i32>} : memref<16x896xf32, #tpu.memory_space<vmem>>, vector<16x896xf32>,
    return
  }
  func.func @transform_0(%arg0: i32) -> (i32, i32) {
    %c0_i32 = arith.constant 0 : i32
    %c0_i32_0 = arith.constant 0 : i32
    return %arg0, %c0_i32 : i32, i32
  }
  func.func @transform_1(%arg0: i32) -> (i32, i32) {
    %c0_i32 = arith.constant 0 : i32
    %c0_i32_0 = arith.constant 0 : i32
    %c0_i32_1 = arith.constant 0 : i32
    return %c0_i32, %c0_i32_0 : i32, i32
  }
  func.func @transform_2(%arg0: i32) -> (i32, i32) {
    %c0_i32 = arith.constant 0 : i32
    %c0_i32_0 = arith.constant 0 : i32
    %c0_i32_1 = arith.constant 0 : i32
    return %c0_i32, %c0_i32_0 : i32, i32
  }
  func.func @transform_3(%arg0: i32) -> (i32, i32) {
    %c0_i32 = arith.constant 0 : i32
    %c0_i32_0 = arith.constant 0 : i32
    %c0_i32_1 = arith.constant 0 : i32
    return %c0_i32, %c0_i32_0 : i32, i32
  }
  func.func @transform_4(%arg0: i32) -> (i32, i32) {
    %c0_i32 = arith.constant 0 : i32
    %c0_i32_0 = arith.constant 0 : i32
    %c0_i32_1 = arith.constant 0 : i32
    return %c0_i32, %c0_i32_0 : i32, i32
  }
  func.func @transform_5(%arg0: i32) -> (i32, i32) {
    %c0_i32 = arith.constant 0 : i32
    %c0_i32_0 = arith.constant 0 : i32
    return %arg0, %c0_i32 : i32, i32
  }
}

</mosaic_0001>

<llo_original>
// kernel: tpu_custom_call.1
$region0: #{tpu_custom_call.1}
  #allocation0 [shape = 'u32[]', space=smem, size = 0x4, offset = 0x4, fixed_abs, tag = 'smem constant byte address 0x4 - core index']
  #allocation1 [shape = 'u32[144,128]{1,0:T(1,128)}', space=vmem, size = 0x12000, scoped, tag = 'internal scratch']
  %s0 = inlined_call_operand.hbm [shape: bf16[16,64], index: 0, kind: input, shape index: {}]
  %s1 = inlined_call_operand.hbm [shape: bf16[64,256], index: 1, kind: input, shape index: {}]
  %s2 = inlined_call_operand.vmem [shape: f32[1,256], index: 2, kind: input, shape index: {}]
  %s3 = inlined_call_operand.hbm [shape: bf16[256,896], index: 3, kind: input, shape index: {}]
  %s4 = inlined_call_operand.vmem [shape: f32[1,896], index: 4, kind: input, shape index: {}]
  %s5 = inlined_call_operand.hbm [shape: f32[16,896], index: 5, kind: output, shape index: {}]
  %s6 = sld [smem:[#allocation0]]
  $region42: #{tpu_custom_call.1} parent=0
    _
  %s8 = ssub.s32 1, %s6
  %s9 = scalar_select 0, %s8, %s6
  $region1: #{tpu_custom_call.1} parent=0
    #allocation2 [shape = 'u8[4096]{0}', space=vmem, size = 0x1000, scoped, tag = 'input window, operand 0, single buffered']
    #allocation3 [shape = 's32[1]{0}', space=sflag, size = 0x4, scoped, tag = 'scoped memory for tpu_custom_call.1']
    #allocation4 [shape = 's32[1]{0}', space=sflag, size = 0x4, scoped, tag = 'scoped memory for tpu_custom_call.1']
    #allocation5 [shape = 'u8[32768]{0}', space=vmem, size = 0x8000, scoped, tag = 'input window, operand 1, single buffered']
    #allocation6 [shape = 's32[1]{0}', space=sflag, size = 0x4, scoped, tag = 'scoped memory for tpu_custom_call.1']
    #allocation7 [shape = 'u8[458752]{0}', space=vmem, size = 0x70000, scoped, tag = 'input window, operand 3, single buffered']
    #allocation8 [shape = 'u8[57344]{0}', space=vmem, size = 0xe000, scoped, tag = 'output window, operand 0, single buffered']
    %10 = vsyncpa [#allocation3], 0
    %11 = vsyncpa [#allocation6], 0
    %12 = vsyncpa [#allocation4], 0
    // Predicated region
    $region2: #{tpu_custom_call.1} parent=1 // pred_check
      _
    $region3: #{tpu_custom_call.1} parent=1 // pred_check_branch
      %14 = sbr.rel (0) target = $region5
    $region4: #{tpu_custom_call.1} parent=1 // pred_region
      %s16 = ssub.s32 128, 128
      %17 = vsyncadd [#allocation3], %s16
      %s18 = sshll.u32 [#allocation2], 4
      %s19 = int_to_ptr.vmem [resolvable:$true] %s18
      %24 = dma.hbm_to_vmem [thread:$0]  %s0, 128, %s19, [#allocation3], 64, 64, 4
    $region5: #{tpu_custom_call.1} parent=1 // pred_fallthru
      _
    // Predicated region
    $region6: #{tpu_custom_call.1} parent=1 // pred_check
      _
    $region7: #{tpu_custom_call.1} parent=1 // pred_check_branch
      %26 = sbr.rel (0) target = $region9
    $region8: #{tpu_custom_call.1} parent=1 // pred_region
      %s28 = ssub.s32 1024, 1024
      %29 = vsyncadd [#allocation6], %s28
      %s30 = sshll.u32 [#allocation5], 4
      %s31 = int_to_ptr.vmem [resolvable:$true] %s30
      %36 = dma.hbm_to_vmem [thread:$0]  %s1, 1024, %s31, [#allocation6], 128, 128, 8
    $region9: #{tpu_custom_call.1} parent=1 // pred_fallthru
      _
    // Predicated region
    $region10: #{tpu_custom_call.1} parent=1 // pred_check
      _
    $region11: #{tpu_custom_call.1} parent=1 // pred_check_branch
      %38 = sbr.rel (0) target = $region13
    $region12: #{tpu_custom_call.1} parent=1 // pred_region
      _
    $region13: #{tpu_custom_call.1} parent=1 // pred_fallthru
      _
    // Predicated region
    $region14: #{tpu_custom_call.1} parent=1 // pred_check
      _
    $region15: #{tpu_custom_call.1} parent=1 // pred_check_branch
      %40 = sbr.rel (0) target = $region17
    $region16: #{tpu_custom_call.1} parent=1 // pred_region
      %s42 = ssub.s32 14336, 14336
      %43 = vsyncadd [#allocation6], %s42
      %s44 = sshll.u32 [#allocation7], 4
      %s45 = int_to_ptr.vmem [resolvable:$true] %s44
      %50 = dma.hbm_to_vmem [thread:$0]  %s3, 14336, %s45, [#allocation6], 448, 448, 28
    $region17: #{tpu_custom_call.1} parent=1 // pred_fallthru
      _
    // Predicated region
    $region18: #{tpu_custom_call.1} parent=1 // pred_check
      _
    $region19: #{tpu_custom_call.1} parent=1 // pred_check_branch
      %52 = sbr.rel (0) target = $region21
    $region20: #{tpu_custom_call.1} parent=1 // pred_region
      _
    $region21: #{tpu_custom_call.1} parent=1 // pred_fallthru
      _
    // Predicated region
    $region22: #{tpu_custom_call.1} parent=1 // pred_check
      _
    $region23: #{tpu_custom_call.1} parent=1 // pred_check_branch
      %54 = sbr.rel (0) target = $region25
    $region24: #{tpu_custom_call.1} parent=1 // pred_region
      %55 = dma.done [#allocation3], 128
    $region25: #{tpu_custom_call.1} parent=1 // pred_fallthru
      _
    // Predicated region
    $region26: #{tpu_custom_call.1} parent=1 // pred_check
      _
    $region27: #{tpu_custom_call.1} parent=1 // pred_check_branch
      %57 = sbr.rel (0) target = $region29
    $region28: #{tpu_custom_call.1} parent=1 // pred_region
      %58 = dma.done [#allocation6], 1024
    $region29: #{tpu_custom_call.1} parent=1 // pred_fallthru
      _
    // Predicated region
    $region30: #{tpu_custom_call.1} parent=1 // pred_check
      _
    $region31: #{tpu_custom_call.1} parent=1 // pred_check_branch
      %60 = sbr.rel (0) target = $region33
    $region32: #{tpu_custom_call.1} parent=1 // pred_region
      %61 = dma.done [#allocation6], 14336
    $region33: #{tpu_custom_call.1} parent=1 // pred_fallthru
      _
    %v63 = vld [vmem:[#allocation2] sm:$0xf]
    %v64 = vld [vmem:[#allocation2 + $0x4] sm:$0xf]
    %v65 = vld [vmem:[#allocation5] sm:$0xff]
    %v66 = vld [vmem:[#allocation5 + $0x8] sm:$0xff]
    %v67 = vld [vmem:[#allocation5 + $0x10] sm:$0xff]
    %v68 = vld [vmem:[#allocation5 + $0x18] sm:$0xff]
    %v69 = vld [vmem:[#allocation5 + $0x20] sm:$0xff]
    %v70 = vld [vmem:[#allocation5 + $0x28] sm:$0xff]
    %v71 = vld [vmem:[#allocation5 + $0x30] sm:$0xff]
    %v72 = vld [vmem:[#allocation5 + $0x38] sm:$0xff]
    %v73 = vld [vmem:[%s2] sm:$0x3]
    %v75 = vlaneseq
    %v76 = vshrl.u32 %v75, 7
    %v77 = vsub.s32 0, %v76
    %v78 = vrot.slane %v73, %v77
    %v79 = vlaneseq
    %v80 = vshrl.u32 %v79, 7
    %v81 = vsub.s32 1, %v80
    %v82 = vrot.slane %v73, %v81
    %v87 = vunpack.c.l.b16 %v63
    %v88 = vunpack.c.l.b16 %v64
    %v89 = vpack.c.b16 %v88, %v87
    %v98 = vunpack.c.l.b16 %v65
    %v99 = vunpack.c.h.b16 %v65
    %v100 = vunpack.c.l.b16 %v66
    %v101 = vunpack.c.h.b16 %v66
    %v102 = vunpack.c.l.b16 %v67
    %v103 = vunpack.c.h.b16 %v67
    %v104 = vunpack.c.l.b16 %v68
    %v105 = vunpack.c.h.b16 %v68
    %v106 = vunpack.c.l.b16 %v69
    %v107 = vunpack.c.h.b16 %v69
    %v108 = vunpack.c.l.b16 %v70
    %v109 = vunpack.c.h.b16 %v70
    %v110 = vunpack.c.l.b16 %v71
    %v111 = vunpack.c.h.b16 %v71
    %v112 = vunpack.c.l.b16 %v72
    %v113 = vunpack.c.h.b16 %v72
    %v114 = vpack.c.b16 %v100, %v98
    %v115 = vpack.c.b16 %v101, %v99
    %v116 = vpack.c.b16 %v104, %v102
    %v117 = vpack.c.b16 %v105, %v103
    %v118 = vpack.c.b16 %v108, %v106
    %v119 = vpack.c.b16 %v109, %v107
    %v120 = vpack.c.b16 %v112, %v110
    %v121 = vpack.c.b16 %v113, %v111
    %vm130 = vcmask 523264
    %v132 = vsel %vm130, %v89, 0
    %134 = vmatprep.subr.bf16.mxu0 %v115
    %135 = vmatpush1.bf16.msra.mxu0 %v114
    %136 = vmatprep.subr.bf16.mxu0 %v117
    %137 = vmatpush1.bf16.msra.mxu0 %v116
    %138 = vmatprep.subr.bf16.mxu0 %v119
    %139 = vmatpush1.bf16.msra.mxu0 %v118
    %140 = vmatprep.subr.bf16.mxu0 %v121
    %141 = vmatpush1.bf16.msra.mxu0 %v120
    %142 = vmatprep.subr.bf16.mxu0 0
    %143 = vmatpush1.bf16.msra.mxu0 0
    %144 = vmatprep.subr.bf16.mxu0 0
    %145 = vmatpush1.bf16.msra.mxu0 0
    %146 = vmatprep.subr.bf16.mxu0 0
    %147 = vmatpush1.bf16.msra.mxu0 0
    %148 = vmatprep.subr.bf16.mxu0 0
    %149 = vmatpush1.bf16.msra.mxu0 0
    %150 = vmatprep.subr.bf16.mxu0 0
    %151 = vmatpush1.bf16.msra.mxu0 0
    %152 = vmatprep.subr.bf16.mxu0 0
    %153 = vmatpush1.bf16.msra.mxu0 0
    %154 = vmatprep.subr.bf16.mxu0 0
    %155 = vmatpush1.bf16.msra.mxu0 0
    %156 = vmatprep.subr.bf16.mxu0 0
    %157 = vmatpush1.bf16.msra.mxu0 0
    %158 = vmatprep.subr.bf16.mxu0 0
    %159 = vmatpush1.bf16.msra.mxu0 0
    %160 = vmatprep.subr.bf16.mxu0 0
    %161 = vmatpush1.bf16.msra.mxu0 0
    %162 = vmatprep.subr.bf16.mxu0 0
    %163 = vmatpush1.bf16.msra.mxu0 0
    %164 = vmatprep.subr.bf16.mxu0 0
    %165 = vmatpush1.bf16.msra.mxu0 0
    %166 = vmatprep.mubr.bf16.mxu0 0
    %167 = vmatmul.mubr.bf16.gmra.mrb[0].mxu0 %v132
    %v168 = vpop.f32.mrb[0].mxu0
    %v169 = vadd.f32 %v78, %v168
    %v170 = vpop.f32.mrb[0].mxu0
    %v171 = vadd.f32 %v82, %v170
    %v172 = vpop.f32.mrb[0].mxu0
    %v173 = vadd.f32 %v78, %v172
    %v174 = vpop.f32.mrb[0].mxu0
    %v175 = vadd.f32 %v82, %v174
    %176 = vdwg.mxu0
    %vm177 = vcmp.gt.f32.partialorder %v169, 0.0
    %vm178 = vcmp.gt.f32.partialorder %v171, 0.0
    %vm179 = vcmp.gt.f32.partialorder %v173, 0.0
    %vm180 = vcmp.gt.f32.partialorder %v175, 0.0
    %v181 = vmul.f32 %v169, 0.2
    %v182 = vmul.f32 %v171, 0.2
    %v183 = vmul.f32 %v173, 0.2
    %v184 = vmul.f32 %v175, 0.2
    %v185 = vsel %vm177, %v169, %v181
    %v186 = vsel %vm178, %v171, %v182
    %v187 = vsel %vm179, %v173, %v183
    %v188 = vsel %vm180, %v175, %v184
    %v189 = vpack.c.bf16 %v187, %v185
    %v190 = vpack.c.bf16 %v188, %v186
    %v191 = vld [vmem:[#allocation7] sm:$0xff]
    %v192 = vld [vmem:[#allocation7 + $0x8] sm:$0xff]
    %v193 = vld [vmem:[#allocation7 + $0x10] sm:$0xff]
    %v194 = vld [vmem:[#allocation7 + $0x18] sm:$0xf]
    %v195 = vld [vmem:[#allocation7 + $0x1c] sm:$0xff]
    %v196 = vld [vmem:[#allocation7 + $0x24] sm:$0xff]
    %v197 = vld [vmem:[#allocation7 + $0x2c] sm:$0xff]
    %v198 = vld [vmem:[#allocation7 + $0x34] sm:$0xf]
    %v199 = vld [vmem:[#allocation7 + $0x38] sm:$0xff]
    %v200 = vld [vmem:[#allocation7 + $0x40] sm:$0xff]
    %v201 = vld [vmem:[#allocation7 + $0x48] sm:$0xff]
    %v202 = vld [vmem:[#allocation7 + $0x50] sm:$0xf]
    %v203 = vld [vmem:[#allocation7 + $0x54] sm:$0xff]
    %v204 = vld [vmem:[#allocation7 + $0x5c] sm:$0xff]
    %v205 = vld [vmem:[#allocation7 + $0x64] sm:$0xff]
    %v206 = vld [vmem:[#allocation7 + $0x6c] sm:$0xf]
    %v207 = vld [vmem:[#allocation7 + $0x70] sm:$0xff]
    %v208 = vld [vmem:[#allocation7 + $0x78] sm:$0xff]
    %v209 = vld [vmem:[#allocation7 + $0x80] sm:$0xff]
    %v210 = vld [vmem:[#allocation7 + $0x88] sm:$0xf]
    %v211 = vld [vmem:[#allocation7 + $0x8c] sm:$0xff]
    %v212 = vld [vmem:[#allocation7 + $0x94] sm:$0xff]
    %v213 = vld [vmem:[#allocation7 + $0x9c] sm:$0xff]
    %v214 = vld [vmem:[#allocation7 + $0xa4] sm:$0xf]
    %v215 = vld [vmem:[#allocation7 + $0xa8] sm:$0xff]
    %v216 = vld [vmem:[#allocation7 + $0xb0] sm:$0xff]
    %v217 = vld [vmem:[#allocation7 + $0xb8] sm:$0xff]
    %v218 = vld [vmem:[#allocation7 + $0xc0] sm:$0xf]
    %v219 = vld [vmem:[#allocation7 + $0xc4] sm:$0xff]
    %v220 = vld [vmem:[#allocation7 + $0xcc] sm:$0xff]
    %v221 = vld [vmem:[#allocation7 + $0xd4] sm:$0xff]
    %v222 = vld [vmem:[#allocation7 + $0xdc] sm:$0xf]
    %v223 = vld [vmem:[#allocation7 + $0xe0] sm:$0xff]
    %v224 = vld [vmem:[#allocation7 + $0xe8] sm:$0xff]
    %v225 = vld [vmem:[#allocation7 + $0xf0] sm:$0xff]
    %v226 = vld [vmem:[#allocation7 + $0xf8] sm:$0xf]
    %v227 = vld [vmem:[#allocation7 + $0xfc] sm:$0xff]
    %v228 = vld [vmem:[#allocation7 + $0x104] sm:$0xff]
    %v229 = vld [vmem:[#allocation7 + $0x10c] sm:$0xff]
    %v230 = vld [vmem:[#allocation7 + $0x114] sm:$0xf]
    %v231 = vld [vmem:[#allocation7 + $0x118] sm:$0xff]
    %v232 = vld [vmem:[#allocation7 + $0x120] sm:$0xff]
    %v233 = vld [vmem:[#allocation7 + $0x128] sm:$0xff]
    %v234 = vld [vmem:[#allocation7 + $0x130] sm:$0xf]
    %v235 = vld [vmem:[#allocation7 + $0x134] sm:$0xff]
    %v236 = vld [vmem:[#allocation7 + $0x13c] sm:$0xff]
    %v237 = vld [vmem:[#allocation7 + $0x144] sm:$0xff]
    %v238 = vld [vmem:[#allocation7 + $0x14c] sm:$0xf]
    %v239 = vld [vmem:[#allocation7 + $0x150] sm:$0xff]
    %v240 = vld [vmem:[#allocation7 + $0x158] sm:$0xff]
    %v241 = vld [vmem:[#allocation7 + $0x160] sm:$0xff]
    %v242 = vld [vmem:[#allocation7 + $0x168] sm:$0xf]
    %v243 = vld [vmem:[#allocation7 + $0x16c] sm:$0xff]
    %v244 = vld [vmem:[#allocation7 + $0x174] sm:$0xff]
    %v245 = vld [vmem:[#allocation7 + $0x17c] sm:$0xff]
    %v246 = vld [vmem:[#allocation7 + $0x184] sm:$0xf]
    %v247 = vld [vmem:[#allocation7 + $0x188] sm:$0xff]
    %v248 = vld [vmem:[#allocation7 + $0x190] sm:$0xff]
    %v249 = vld [vmem:[#allocation7 + $0x198] sm:$0xff]
    %v250 = vld [vmem:[#allocation7 + $0x1a0] sm:$0xf]
    %v251 = vld [vmem:[#allocation7 + $0x1a4] sm:$0xff]
    %v252 = vld [vmem:[#allocation7 + $0x1ac] sm:$0xff]
    %v253 = vld [vmem:[#allocation7 + $0x1b4] sm:$0xff]
    %v254 = vld [vmem:[#allocation7 + $0x1bc] sm:$0xf]
    %v255 = vld [vmem:[#allocation7 + $0x1c0] sm:$0xff]
    %v256 = vld [vmem:[#allocation7 + $0x1c8] sm:$0xff]
    %v257 = vld [vmem:[#allocation7 + $0x1d0] sm:$0xff]
    %v258 = vld [vmem:[#allocation7 + $0x1d8] sm:$0xf]
    %v259 = vld [vmem:[#allocation7 + $0x1dc] sm:$0xff]
    %v260 = vld [vmem:[#allocation7 + $0x1e4] sm:$0xff]
    %v261 = vld [vmem:[#allocation7 + $0x1ec] sm:$0xff]
    %v262 = vld [vmem:[#allocation7 + $0x1f4] sm:$0xf]
    %v263 = vld [vmem:[#allocation7 + $0x1f8] sm:$0xff]
    %v264 = vld [vmem:[#allocation7 + $0x200] sm:$0xff]
    %v265 = vld [vmem:[#allocation7 + $0x208] sm:$0xff]
    %v266 = vld [vmem:[#allocation7 + $0x210] sm:$0xf]
    %v267 = vld [vmem:[#allocation7 + $0x214] sm:$0xff]
    %v268 = vld [vmem:[#allocation7 + $0x21c] sm:$0xff]
    %v269 = vld [vmem:[#allocation7 + $0x224] sm:$0xff]
    %v270 = vld [vmem:[#allocation7 + $0x22c] sm:$0xf]
    %v271 = vld [vmem:[#allocation7 + $0x230] sm:$0xff]
    %v272 = vld [vmem:[#allocation7 + $0x238] sm:$0xff]
    %v273 = vld [vmem:[#allocation7 + $0x240] sm:$0xff]
    %v274 = vld [vmem:[#allocation7 + $0x248] sm:$0xf]
    %v275 = vld [vmem:[#allocation7 + $0x24c] sm:$0xff]
    %v276 = vld [vmem:[#allocation7 + $0x254] sm:$0xff]
    %v277 = vld [vmem:[#allocation7 + $0x25c] sm:$0xff]
    %v278 = vld [vmem:[#allocation7 + $0x264] sm:$0xf]
    %v279 = vld [vmem:[#allocation7 + $0x268] sm:$0xff]
    %v280 = vld [vmem:[#allocation7 + $0x270] sm:$0xff]
    %v281 = vld [vmem:[#allocation7 + $0x278] sm:$0xff]
    %v282 = vld [vmem:[#allocation7 + $0x280] sm:$0xf]
    %v283 = vld [vmem:[#allocation7 + $0x284] sm:$0xff]
    %v284 = vld [vmem:[#allocation7 + $0x28c] sm:$0xff]
    %v285 = vld [vmem:[#allocation7 + $0x294] sm:$0xff]
    %v286 = vld [vmem:[#allocation7 + $0x29c] sm:$0xf]
    %v287 = vld [vmem:[#allocation7 + $0x2a0] sm:$0xff]
    %v288 = vld [vmem:[#allocation7 + $0x2a8] sm:$0xff]
    %v289 = vld [vmem:[#allocation7 + $0x2b0] sm:$0xff]
    %v290 = vld [vmem:[#allocation7 + $0x2b8] sm:$0xf]
    %v291 = vld [vmem:[#allocation7 + $0x2bc] sm:$0xff]
    %v292 = vld [vmem:[#allocation7 + $0x2c4] sm:$0xff]
    %v293 = vld [vmem:[#allocation7 + $0x2cc] sm:$0xff]
    %v294 = vld [vmem:[#allocation7 + $0x2d4] sm:$0xf]
    %v295 = vld [vmem:[#allocation7 + $0x2d8] sm:$0xff]
    %v296 = vld [vmem:[#allocation7 + $0x2e0] sm:$0xff]
    %v297 = vld [vmem:[#allocation7 + $0x2e8] sm:$0xff]
    %v298 = vld [vmem:[#allocation7 + $0x2f0] sm:$0xf]
    %v299 = vld [vmem:[#allocation7 + $0x2f4] sm:$0xff]
    %v300 = vld [vmem:[#allocation7 + $0x2fc] sm:$0xff]
    %v301 = vld [vmem:[#allocation7 + $0x304] sm:$0xff]
    %v302 = vld [vmem:[#allocation7 + $0x30c] sm:$0xf]
    %v303 = vld [vmem:[#allocation7 + $0x310] sm:$0xff]
    %v304 = vld [vmem:[#allocation7 + $0x318] sm:$0xff]
    %v305 = vld [vmem:[#allocation7 + $0x320] sm:$0xff]
    %v306 = vld [vmem:[#allocation7 + $0x328] sm:$0xf]
    %v307 = vld [vmem:[#allocation7 + $0x32c] sm:$0xff]
    %v308 = vld [vmem:[#allocation7 + $0x334] sm:$0xff]
    %v309 = vld [vmem:[#allocation7 + $0x33c] sm:$0xff]
    %v310 = vld [vmem:[#allocation7 + $0x344] sm:$0xf]
    %v311 = vld [vmem:[#allocation7 + $0x348] sm:$0xff]
    %v312 = vld [vmem:[#allocation7 + $0x350] sm:$0xff]
    %v313 = vld [vmem:[#allocation7 + $0x358] sm:$0xff]
    %v314 = vld [vmem:[#allocation7 + $0x360] sm:$0xf]
    %v315 = vld [vmem:[#allocation7 + $0x364] sm:$0xff]
    %v316 = vld [vmem:[#allocation7 + $0x36c] sm:$0xff]
    %v317 = vld [vmem:[#allocation7 + $0x374] sm:$0xff]
    %v318 = vld [vmem:[#allocation7 + $0x37c] sm:$0xf]
    %v319 = vld [vmem:[%s4] sm:$0xff]
    %v321 = vlaneseq
    %v322 = vshrl.u32 %v321, 7
    %v323 = vsub.s32 0, %v322
    %v324 = vrot.slane %v319, %v323
    %v325 = vlaneseq
    %v326 = vshrl.u32 %v325, 7
    %v327 = vsub.s32 1, %v326
    %v328 = vrot.slane %v319, %v327
    %v329 = vlaneseq
    %v330 = vshrl.u32 %v329, 7
    %v331 = vsub.s32 2, %v330
    %v332 = vrot.slane %v319, %v331
    %v333 = vlaneseq
    %v334 = vshrl.u32 %v333, 7
    %v335 = vsub.s32 3, %v334
    %v336 = vrot.slane %v319, %v335
    %v337 = vlaneseq
    %v338 = vshrl.u32 %v337, 7
    %v339 = vsub.s32 4, %v338
    %v340 = vrot.slane %v319, %v339
    %v341 = vlaneseq
    %v342 = vshrl.u32 %v341, 7
    %v343 = vsub.s32 5, %v342
    %v344 = vrot.slane %v319, %v343
    %v345 = vlaneseq
    %v346 = vshrl.u32 %v345, 7
    %v347 = vsub.s32 6, %v346
    %v348 = vrot.slane %v319, %v347
    %v484 = vunpack.c.l.b16 %v191
    %v485 = vunpack.c.h.b16 %v191
    %v486 = vunpack.c.l.b16 %v192
    %v487 = vunpack.c.h.b16 %v192
    %v488 = vunpack.c.l.b16 %v193
    %v489 = vunpack.c.h.b16 %v193
    %v490 = vunpack.c.l.b16 %v194
    %v491 = vunpack.c.l.b16 %v195
    %v492 = vunpack.c.h.b16 %v195
    %v493 = vunpack.c.l.b16 %v196
    %v494 = vunpack.c.h.b16 %v196
    %v495 = vunpack.c.l.b16 %v197
    %v496 = vunpack.c.h.b16 %v197
    %v497 = vunpack.c.l.b16 %v198
    %v498 = vunpack.c.l.b16 %v199
    %v499 = vunpack.c.h.b16 %v199
    %v500 = vunpack.c.l.b16 %v200
    %v501 = vunpack.c.h.b16 %v200
    %v502 = vunpack.c.l.b16 %v201
    %v503 = vunpack.c.h.b16 %v201
    %v504 = vunpack.c.l.b16 %v202
    %v505 = vunpack.c.l.b16 %v203
    %v506 = vunpack.c.h.b16 %v203
    %v507 = vunpack.c.l.b16 %v204
    %v508 = vunpack.c.h.b16 %v204
    %v509 = vunpack.c.l.b16 %v205
    %v510 = vunpack.c.h.b16 %v205
    %v511 = vunpack.c.l.b16 %v206
    %v512 = vunpack.c.l.b16 %v207
    %v513 = vunpack.c.h.b16 %v207
    %v514 = vunpack.c.l.b16 %v208
    %v515 = vunpack.c.h.b16 %v208
    %v516 = vunpack.c.l.b16 %v209
    %v517 = vunpack.c.h.b16 %v209
    %v518 = vunpack.c.l.b16 %v210
    %v519 = vunpack.c.l.b16 %v211
    %v520 = vunpack.c.h.b16 %v211
    %v521 = vunpack.c.l.b16 %v212
    %v522 = vunpack.c.h.b16 %v212
    %v523 = vunpack.c.l.b16 %v213
    %v524 = vunpack.c.h.b16 %v213
    %v525 = vunpack.c.l.b16 %v214
    %v526 = vunpack.c.l.b16 %v215
    %v527 = vunpack.c.h.b16 %v215
    %v528 = vunpack.c.l.b16 %v216
    %v529 = vunpack.c.h.b16 %v216
    %v530 = vunpack.c.l.b16 %v217
    %v531 = vunpack.c.h.b16 %v217
    %v532 = vunpack.c.l.b16 %v218
    %v533 = vunpack.c.l.b16 %v219
    %v534 = vunpack.c.h.b16 %v219
    %v535 = vunpack.c.l.b16 %v220
    %v536 = vunpack.c.h.b16 %v220
    %v537 = vunpack.c.l.b16 %v221
    %v538 = vunpack.c.h.b16 %v221
    %v539 = vunpack.c.l.b16 %v222
    %v540 = vunpack.c.l.b16 %v223
    %v541 = vunpack.c.h.b16 %v223
    %v542 = vunpack.c.l.b16 %v224
    %v543 = vunpack.c.h.b16 %v224
    %v544 = vunpack.c.l.b16 %v225
    %v545 = vunpack.c.h.b16 %v225
    %v546 = vunpack.c.l.b16 %v226
    %v547 = vunpack.c.l.b16 %v227
    %v548 = vunpack.c.h.b16 %v227
    %v549 = vunpack.c.l.b16 %v228
    %v550 = vunpack.c.h.b16 %v228
    %v551 = vunpack.c.l.b16 %v229
    %v552 = vunpack.c.h.b16 %v229
    %v553 = vunpack.c.l.b16 %v230
    %v554 = vunpack.c.l.b16 %v231
    %v555 = vunpack.c.h.b16 %v231
    %v556 = vunpack.c.l.b16 %v232
    %v557 = vunpack.c.h.b16 %v232
    %v558 = vunpack.c.l.b16 %v233
    %v559 = vunpack.c.h.b16 %v233
    %v560 = vunpack.c.l.b16 %v234
    %v561 = vunpack.c.l.b16 %v235
    %v562 = vunpack.c.h.b16 %v235
    %v563 = vunpack.c.l.b16 %v236
    %v564 = vunpack.c.h.b16 %v236
    %v565 = vunpack.c.l.b16 %v237
    %v566 = vunpack.c.h.b16 %v237
    %v567 = vunpack.c.l.b16 %v238
    %v568 = vunpack.c.l.b16 %v239
    %v569 = vunpack.c.h.b16 %v239
    %v570 = vunpack.c.l.b16 %v240
    %v571 = vunpack.c.h.b16 %v240
    %v572 = vunpack.c.l.b16 %v241
    %v573 = vunpack.c.h.b16 %v241
    %v574 = vunpack.c.l.b16 %v242
    %v575 = vunpack.c.l.b16 %v243
    %v576 = vunpack.c.h.b16 %v243
    %v577 = vunpack.c.l.b16 %v244
    %v578 = vunpack.c.h.b16 %v244
    %v579 = vunpack.c.l.b16 %v245
    %v580 = vunpack.c.h.b16 %v245
    %v581 = vunpack.c.l.b16 %v246
    %v582 = vunpack.c.l.b16 %v247
    %v583 = vunpack.c.h.b16 %v247
    %v584 = vunpack.c.l.b16 %v248
    %v585 = vunpack.c.h.b16 %v248
    %v586 = vunpack.c.l.b16 %v249
    %v587 = vunpack.c.h.b16 %v249
    %v588 = vunpack.c.l.b16 %v250
    %v589 = vunpack.c.l.b16 %v251
    %v590 = vunpack.c.h.b16 %v251
    %v591 = vunpack.c.l.b16 %v252
    %v592 = vunpack.c.h.b16 %v252
    %v593 = vunpack.c.l.b16 %v253
    %v594 = vunpack.c.h.b16 %v253
    %v595 = vunpack.c.l.b16 %v254
    %v596 = vunpack.c.l.b16 %v255
    %v597 = vunpack.c.h.b16 %v255
    %v598 = vunpack.c.l.b16 %v256
    %v599 = vunpack.c.h.b16 %v256
    %v600 = vunpack.c.l.b16 %v257
    %v601 = vunpack.c.h.b16 %v257
    %v602 = vunpack.c.l.b16 %v258
    %v603 = vunpack.c.l.b16 %v259
    %v604 = vunpack.c.h.b16 %v259
    %v605 = vunpack.c.l.b16 %v260
    %v606 = vunpack.c.h.b16 %v260
    %v607 = vunpack.c.l.b16 %v261
    %v608 = vunpack.c.h.b16 %v261
    %v609 = vunpack.c.l.b16 %v262
    %v610 = vunpack.c.l.b16 %v263
    %v611 = vunpack.c.h.b16 %v263
    %v612 = vunpack.c.l.b16 %v264
    %v613 = vunpack.c.h.b16 %v264
    %v614 = vunpack.c.l.b16 %v265
    %v615 = vunpack.c.h.b16 %v265
    %v616 = vunpack.c.l.b16 %v266
    %v617 = vunpack.c.l.b16 %v267
    %v618 = vunpack.c.h.b16 %v267
    %v619 = vunpack.c.l.b16 %v268
    %v620 = vunpack.c.h.b16 %v268
    %v621 = vunpack.c.l.b16 %v269
    %v622 = vunpack.c.h.b16 %v269
    %v623 = vunpack.c.l.b16 %v270
    %v624 = vunpack.c.l.b16 %v271
    %v625 = vunpack.c.h.b16 %v271
    %v626 = vunpack.c.l.b16 %v272
    %v627 = vunpack.c.h.b16 %v272
    %v628 = vunpack.c.l.b16 %v273
    %v629 = vunpack.c.h.b16 %v273
    %v630 = vunpack.c.l.b16 %v274
    %v631 = vunpack.c.l.b16 %v275
    %v632 = vunpack.c.h.b16 %v275
    %v633 = vunpack.c.l.b16 %v276
    %v634 = vunpack.c.h.b16 %v276
    %v635 = vunpack.c.l.b16 %v277
    %v636 = vunpack.c.h.b16 %v277
    %v637 = vunpack.c.l.b16 %v278
    %v638 = vunpack.c.l.b16 %v279
    %v639 = vunpack.c.h.b16 %v279
    %v640 = vunpack.c.l.b16 %v280
    %v641 = vunpack.c.h.b16 %v280
    %v642 = vunpack.c.l.b16 %v281
    %v643 = vunpack.c.h.b16 %v281
    %v644 = vunpack.c.l.b16 %v282
    %v645 = vunpack.c.l.b16 %v283
    %v646 = vunpack.c.h.b16 %v283
    %v647 = vunpack.c.l.b16 %v284
    %v648 = vunpack.c.h.b16 %v284
    %v649 = vunpack.c.l.b16 %v285
    %v650 = vunpack.c.h.b16 %v285
    %v651 = vunpack.c.l.b16 %v286
    %v652 = vunpack.c.l.b16 %v287
    %v653 = vunpack.c.h.b16 %v287
    %v654 = vunpack.c.l.b16 %v288
    %v655 = vunpack.c.h.b16 %v288
    %v656 = vunpack.c.l.b16 %v289
    %v657 = vunpack.c.h.b16 %v289
    %v658 = vunpack.c.l.b16 %v290
    %v659 = vunpack.c.l.b16 %v291
    %v660 = vunpack.c.h.b16 %v291
    %v661 = vunpack.c.l.b16 %v292
    %v662 = vunpack.c.h.b16 %v292
    %v663 = vunpack.c.l.b16 %v293
    %v664 = vunpack.c.h.b16 %v293
    %v665 = vunpack.c.l.b16 %v294
    %v666 = vunpack.c.l.b16 %v295
    %v667 = vunpack.c.h.b16 %v295
    %v668 = vunpack.c.l.b16 %v296
    %v669 = vunpack.c.h.b16 %v296
    %v670 = vunpack.c.l.b16 %v297
    %v671 = vunpack.c.h.b16 %v297
    %v672 = vunpack.c.l.b16 %v298
    %v673 = vunpack.c.l.b16 %v299
    %v674 = vunpack.c.h.b16 %v299
    %v675 = vunpack.c.l.b16 %v300
    %v676 = vunpack.c.h.b16 %v300
    %v677 = vunpack.c.l.b16 %v301
    %v678 = vunpack.c.h.b16 %v301
    %v679 = vunpack.c.l.b16 %v302
    %v680 = vunpack.c.l.b16 %v303
    %v681 = vunpack.c.h.b16 %v303
    %v682 = vunpack.c.l.b16 %v304
    %v683 = vunpack.c.h.b16 %v304
    %v684 = vunpack.c.l.b16 %v305
    %v685 = vunpack.c.h.b16 %v305
    %v686 = vunpack.c.l.b16 %v306
    %v687 = vunpack.c.l.b16 %v307
    %v688 = vunpack.c.h.b16 %v307
    %v689 = vunpack.c.l.b16 %v308
    %v690 = vunpack.c.h.b16 %v308
    %v691 = vunpack.c.l.b16 %v309
    %v692 = vunpack.c.h.b16 %v309
    %v693 = vunpack.c.l.b16 %v310
    %v694 = vunpack.c.l.b16 %v311
    %v695 = vunpack.c.h.b16 %v311
    %v696 = vunpack.c.l.b16 %v312
    %v697 = vunpack.c.h.b16 %v312
    %v698 = vunpack.c.l.b16 %v313
    %v699 = vunpack.c.h.b16 %v313
    %v700 = vunpack.c.l.b16 %v314
    %v701 = vunpack.c.l.b16 %v315
    %v702 = vunpack.c.h.b16 %v315
    %v703 = vunpack.c.l.b16 %v316
    %v704 = vunpack.c.h.b16 %v316
    %v705 = vunpack.c.l.b16 %v317
    %v706 = vunpack.c.h.b16 %v317
    %v707 = vunpack.c.l.b16 %v318
    %v708 = vpack.c.b16 %v491, %v484
    %v709 = vpack.c.b16 %v492, %v485
    %v710 = vpack.c.b16 %v493, %v486
    %v711 = vpack.c.b16 %v494, %v487
    %v712 = vpack.c.b16 %v495, %v488
    %v713 = vpack.c.b16 %v496, %v489
    %v714 = vpack.c.b16 %v497, %v490
    %v715 = vpack.c.b16 %v505, %v498
    %v716 = vpack.c.b16 %v506, %v499
    %v717 = vpack.c.b16 %v507, %v500
    %v718 = vpack.c.b16 %v508, %v501
    %v719 = vpack.c.b16 %v509, %v502
    %v720 = vpack.c.b16 %v510, %v503
    %v721 = vpack.c.b16 %v511, %v504
    %v722 = vpack.c.b16 %v519, %v512
    %v723 = vpack.c.b16 %v520, %v513
    %v724 = vpack.c.b16 %v521, %v514
    %v725 = vpack.c.b16 %v522, %v515
    %v726 = vpack.c.b16 %v523, %v516
    %v727 = vpack.c.b16 %v524, %v517
    %v728 = vpack.c.b16 %v525, %v518
    %v729 = vpack.c.b16 %v533, %v526
    %v730 = vpack.c.b16 %v534, %v527
    %v731 = vpack.c.b16 %v535, %v528
    %v732 = vpack.c.b16 %v536, %v529
    %v733 = vpack.c.b16 %v537, %v530
    %v734 = vpack.c.b16 %v538, %v531
    %v735 = vpack.c.b16 %v539, %v532
    %v736 = vpack.c.b16 %v547, %v540
    %v737 = vpack.c.b16 %v548, %v541
    %v738 = vpack.c.b16 %v549, %v542
    %v739 = vpack.c.b16 %v550, %v543
    %v740 = vpack.c.b16 %v551, %v544
    %v741 = vpack.c.b16 %v552, %v545
    %v742 = vpack.c.b16 %v553, %v546
    %v743 = vpack.c.b16 %v561, %v554
    %v744 = vpack.c.b16 %v562, %v555
    %v745 = vpack.c.b16 %v563, %v556
    %v746 = vpack.c.b16 %v564, %v557
    %v747 = vpack.c.b16 %v565, %v558
    %v748 = vpack.c.b16 %v566, %v559
    %v749 = vpack.c.b16 %v567, %v560
    %v750 = vpack.c.b16 %v575, %v568
    %v751 = vpack.c.b16 %v576, %v569
    %v752 = vpack.c.b16 %v577, %v570
    %v753 = vpack.c.b16 %v578, %v571
    %v754 = vpack.c.b16 %v579, %v572
    %v755 = vpack.c.b16 %v580, %v573
    %v756 = vpack.c.b16 %v581, %v574
    %v757 = vpack.c.b16 %v589, %v582
    %v758 = vpack.c.b16 %v590, %v583
    %v759 = vpack.c.b16 %v591, %v584
    %v760 = vpack.c.b16 %v592, %v585
    %v761 = vpack.c.b16 %v593, %v586
    %v762 = vpack.c.b16 %v594, %v587
    %v763 = vpack.c.b16 %v595, %v588
    %v764 = vpack.c.b16 %v603, %v596
    %v765 = vpack.c.b16 %v604, %v597
    %v766 = vpack.c.b16 %v605, %v598
    %v767 = vpack.c.b16 %v606, %v599
    %v768 = vpack.c.b16 %v607, %v600
    %v769 = vpack.c.b16 %v608, %v601
    %v770 = vpack.c.b16 %v609, %v602
    %v771 = vpack.c.b16 %v617, %v610
    %v772 = vpack.c.b16 %v618, %v611
    %v773 = vpack.c.b16 %v619, %v612
    %v774 = vpack.c.b16 %v620, %v613
    %v775 = vpack.c.b16 %v621, %v614
    %v776 = vpack.c.b16 %v622, %v615
    %v777 = vpack.c.b16 %v623, %v616
    %v778 = vpack.c.b16 %v631, %v624
    %v779 = vpack.c.b16 %v632, %v625
    %v780 = vpack.c.b16 %v633, %v626
    %v781 = vpack.c.b16 %v634, %v627
    %v782 = vpack.c.b16 %v635, %v628
    %v783 = vpack.c.b16 %v636, %v629
    %v784 = vpack.c.b16 %v637, %v630
    %v785 = vpack.c.b16 %v645, %v638
    %v786 = vpack.c.b16 %v646, %v639
    %v787 = vpack.c.b16 %v647, %v640
    %v788 = vpack.c.b16 %v648, %v641
    %v789 = vpack.c.b16 %v649, %v642
    %v790 = vpack.c.b16 %v650, %v643
    %v791 = vpack.c.b16 %v651, %v644
    %v792 = vpack.c.b16 %v659, %v652
    %v793 = vpack.c.b16 %v660, %v653
    %v794 = vpack.c.b16 %v661, %v654
    %v795 = vpack.c.b16 %v662, %v655
    %v796 = vpack.c.b16 %v663, %v656
    %v797 = vpack.c.b16 %v664, %v657
    %v798 = vpack.c.b16 %v665, %v658
    %v799 = vpack.c.b16 %v673, %v666
    %v800 = vpack.c.b16 %v674, %v667
    %v801 = vpack.c.b16 %v675, %v668
    %v802 = vpack.c.b16 %v676, %v669
    %v803 = vpack.c.b16 %v677, %v670
    %v804 = vpack.c.b16 %v678, %v671
    %v805 = vpack.c.b16 %v679, %v672
    %v806 = vpack.c.b16 %v687, %v680
    %v807 = vpack.c.b16 %v688, %v681
    %v808 = vpack.c.b16 %v689, %v682
    %v809 = vpack.c.b16 %v690, %v683
    %v810 = vpack.c.b16 %v691, %v684
    %v811 = vpack.c.b16 %v692, %v685
    %v812 = vpack.c.b16 %v693, %v686
    %v813 = vpack.c.b16 %v701, %v694
    %v814 = vpack.c.b16 %v702, %v695
    %v815 = vpack.c.b16 %v703, %v696
    %v816 = vpack.c.b16 %v704, %v697
    %v817 = vpack.c.b16 %v705, %v698
    %v818 = vpack.c.b16 %v706, %v699
    %v819 = vpack.c.b16 %v707, %v700
    %932 = vmatprep.subr.bf16.mxu0 %v709
    %933 = vmatpush1.bf16.msra.mxu0 %v708
    %934 = vmatprep.subr.bf16.mxu0 %v716
    %935 = vmatpush1.bf16.msra.mxu0 %v715
    %936 = vmatprep.subr.bf16.mxu0 %v723
    %937 = vmatpush1.bf16.msra.mxu0 %v722
    %938 = vmatprep.subr.bf16.mxu0 %v730
    %939 = vmatpush1.bf16.msra.mxu0 %v729
    %940 = vmatprep.subr.bf16.mxu0 %v737
    %941 = vmatpush1.bf16.msra.mxu0 %v736
    %942 = vmatprep.subr.bf16.mxu0 %v744
    %943 = vmatpush1.bf16.msra.mxu0 %v743
    %944 = vmatprep.subr.bf16.mxu0 %v751
    %945 = vmatpush1.bf16.msra.mxu0 %v750
    %946 = vmatprep.subr.bf16.mxu0 %v758
    %947 = vmatpush1.bf16.msra.mxu0 %v757
    %948 = vmatprep.subr.bf16.mxu0 %v765
    %949 = vmatpush1.bf16.msra.mxu0 %v764
    %950 = vmatprep.subr.bf16.mxu0 %v772
    %951 = vmatpush1.bf16.msra.mxu0 %v771
    %952 = vmatprep.subr.bf16.mxu0 %v779
    %953 = vmatpush1.bf16.msra.mxu0 %v778
    %954 = vmatprep.subr.bf16.mxu0 %v786
    %955 = vmatpush1.bf16.msra.mxu0 %v785
    %956 = vmatprep.subr.bf16.mxu0 %v793
    %957 = vmatpush1.bf16.msra.mxu0 %v792
    %958 = vmatprep.subr.bf16.mxu0 %v800
    %959 = vmatpush1.bf16.msra.mxu0 %v799
    %960 = vmatprep.subr.bf16.mxu0 %v807
    %961 = vmatpush1.bf16.msra.mxu0 %v806
    %962 = vmatprep.subr.bf16.mxu0 %v814
    %963 = vmatpush1.bf16.msra.mxu0 %v813
    %964 = vmatprep.mubr.bf16.mxu0 %v190
    %965 = vmatmul.mubr.bf16.gmra.mrb[0].mxu0 %v189
    %v966 = vpop.f32.mrb[0].mxu0
    %v967 = vadd.f32 %v324, %v966
    %v968 = vpop.f32.mrb[0].mxu0
    %v969 = vadd.f32 %v328, %v968
    %v970 = vpop.f32.mrb[0].mxu0
    %v971 = vadd.f32 %v324, %v970
    %v972 = vpop.f32.mrb[0].mxu0
    %v973 = vadd.f32 %v328, %v972
    %974 = vdwg.mxu0
    %975 = vmatprep.subr.bf16.mxu0 %v711
    %976 = vmatpush1.bf16.msra.mxu0 %v710
    %977 = vmatprep.subr.bf16.mxu0 %v718
    %978 = vmatpush1.bf16.msra.mxu0 %v717
    %979 = vmatprep.subr.bf16.mxu0 %v725
    %980 = vmatpush1.bf16.msra.mxu0 %v724
    %981 = vmatprep.subr.bf16.mxu0 %v732
    %982 = vmatpush1.bf16.msra.mxu0 %v731
    %983 = vmatprep.subr.bf16.mxu0 %v739
    %984 = vmatpush1.bf16.msra.mxu0 %v738
    %985 = vmatprep.subr.bf16.mxu0 %v746
    %986 = vmatpush1.bf16.msra.mxu0 %v745
    %987 = vmatprep.subr.bf16.mxu0 %v753
    %988 = vmatpush1.bf16.msra.mxu0 %v752
    %989 = vmatprep.subr.bf16.mxu0 %v760
    %990 = vmatpush1.bf16.msra.mxu0 %v759
    %991 = vmatprep.subr.bf16.mxu0 %v767
    %992 = vmatpush1.bf16.msra.mxu0 %v766
    %993 = vmatprep.subr.bf16.mxu0 %v774
    %994 = vmatpush1.bf16.msra.mxu0 %v773
    %995 = vmatprep.subr.bf16.mxu0 %v781
    %996 = vmatpush1.bf16.msra.mxu0 %v780
    %997 = vmatprep.subr.bf16.mxu0 %v788
    %998 = vmatpush1.bf16.msra.mxu0 %v787
    %999 = vmatprep.subr.bf16.mxu0 %v795
    %1000 = vmatpush1.bf16.msra.mxu0 %v794
    %1001 = vmatprep.subr.bf16.mxu0 %v802
    %1002 = vmatpush1.bf16.msra.mxu0 %v801
    %1003 = vmatprep.subr.bf16.mxu0 %v809
    %1004 = vmatpush1.bf16.msra.mxu0 %v808
    %1005 = vmatprep.subr.bf16.mxu0 %v816
    %1006 = vmatpush1.bf16.msra.mxu0 %v815
    %1007 = vmatprep.mubr.bf16.mxu0 %v190
    %1008 = vmatmul.mubr.bf16.gmra.mrb[0].mxu0 %v189
    %v1009 = vpop.f32.mrb[0].mxu0
    %v1010 = vadd.f32 %v332, %v1009
    %v1011 = vpop.f32.mrb[0].mxu0
    %v1012 = vadd.f32 %v336, %v1011
    %v1013 = vpop.f32.mrb[0].mxu0
    %v1014 = vadd.f32 %v332, %v1013
    %v1015 = vpop.f32.mrb[0].mxu0
    %v1016 = vadd.f32 %v336, %v1015
    %1017 = vdwg.mxu0
    %1018 = vmatprep.subr.bf16.mxu0 %v713
    %1019 = vmatpush1.bf16.msra.mxu0 %v712
    %1020 = vmatprep.subr.bf16.mxu0 %v720
    %1021 = vmatpush1.bf16.msra.mxu0 %v719
    %1022 = vmatprep.subr.bf16.mxu0 %v727
    %1023 = vmatpush1.bf16.msra.mxu0 %v726
    %1024 = vmatprep.subr.bf16.mxu0 %v734
    %1025 = vmatpush1.bf16.msra.mxu0 %v733
    %1026 = vmatprep.subr.bf16.mxu0 %v741
    %1027 = vmatpush1.bf16.msra.mxu0 %v740
    %1028 = vmatprep.subr.bf16.mxu0 %v748
    %1029 = vmatpush1.bf16.msra.mxu0 %v747
    %1030 = vmatprep.subr.bf16.mxu0 %v755
    %1031 = vmatpush1.bf16.msra.mxu0 %v754
    %1032 = vmatprep.subr.bf16.mxu0 %v762
    %1033 = vmatpush1.bf16.msra.mxu0 %v761
    %1034 = vmatprep.subr.bf16.mxu0 %v769
    %1035 = vmatpush1.bf16.msra.mxu0 %v768
    %1036 = vmatprep.subr.bf16.mxu0 %v776
    %1037 = vmatpush1.bf16.msra.mxu0 %v775
    %1038 = vmatprep.subr.bf16.mxu0 %v783
    %1039 = vmatpush1.bf16.msra.mxu0 %v782
    %1040 = vmatprep.subr.bf16.mxu0 %v790
    %1041 = vmatpush1.bf16.msra.mxu0 %v789
    %1042 = vmatprep.subr.bf16.mxu0 %v797
    %1043 = vmatpush1.bf16.msra.mxu0 %v796
    %1044 = vmatprep.subr.bf16.mxu0 %v804
    %1045 = vmatpush1.bf16.msra.mxu0 %v803
    %1046 = vmatprep.subr.bf16.mxu0 %v811
    %1047 = vmatpush1.bf16.msra.mxu0 %v810
    %1048 = vmatprep.subr.bf16.mxu0 %v818
    %1049 = vmatpush1.bf16.msra.mxu0 %v817
    %1050 = vmatprep.mubr.bf16.mxu0 %v190
    %1051 = vmatmul.mubr.bf16.gmra.mrb[0].mxu0 %v189
    %v1052 = vpop.f32.mrb[0].mxu0
    %v1053 = vadd.f32 %v340, %v1052
    %v1054 = vpop.f32.mrb[0].mxu0
    %v1055 = vadd.f32 %v344, %v1054
    %v1056 = vpop.f32.mrb[0].mxu0
    %v1057 = vadd.f32 %v340, %v1056
    %v1058 = vpop.f32.mrb[0].mxu0
    %v1059 = vadd.f32 %v344, %v1058
    %1060 = vdwg.mxu0
    %1061 = vmatprep.subr.bf16.mxu0 0
    %1062 = vmatpush1.bf16.msra.mxu0 %v714
    %1063 = vmatprep.subr.bf16.mxu0 0
    %1064 = vmatpush1.bf16.msra.mxu0 %v721
    %1065 = vmatprep.subr.bf16.mxu0 0
    %1066 = vmatpush1.bf16.msra.mxu0 %v728
    %1067 = vmatprep.subr.bf16.mxu0 0
    %1068 = vmatpush1.bf16.msra.mxu0 %v735
    %1069 = vmatprep.subr.bf16.mxu0 0
    %1070 = vmatpush1.bf16.msra.mxu0 %v742
    %1071 = vmatprep.subr.bf16.mxu0 0
    %1072 = vmatpush1.bf16.msra.mxu0 %v749
    %1073 = vmatprep.subr.bf16.mxu0 0
    %1074 = vmatpush1.bf16.msra.mxu0 %v756
    %1075 = vmatprep.subr.bf16.mxu0 0
    %1076 = vmatpush1.bf16.msra.mxu0 %v763
    %1077 = vmatprep.subr.bf16.mxu0 0
    %1078 = vmatpush1.bf16.msra.mxu0 %v770
    %1079 = vmatprep.subr.bf16.mxu0 0
    %1080 = vmatpush1.bf16.msra.mxu0 %v777
    %1081 = vmatprep.subr.bf16.mxu0 0
    %1082 = vmatpush1.bf16.msra.mxu0 %v784
    %1083 = vmatprep.subr.bf16.mxu0 0
    %1084 = vmatpush1.bf16.msra.mxu0 %v791
    %1085 = vmatprep.subr.bf16.mxu0 0
    %1086 = vmatpush1.bf16.msra.mxu0 %v798
    %1087 = vmatprep.subr.bf16.mxu0 0
    %1088 = vmatpush1.bf16.msra.mxu0 %v805
    %1089 = vmatprep.subr.bf16.mxu0 0
    %1090 = vmatpush1.bf16.msra.mxu0 %v812
    %1091 = vmatprep.subr.bf16.mxu0 0
    %1092 = vmatpush1.bf16.msra.mxu0 %v819
    %1093 = vmatprep.mubr.bf16.mxu0 %v190
    %1094 = vmatmul.mubr.bf16.gmra.mrb[0].mxu0 %v189
    %v1095 = vpop.f32.mrb[0].mxu0
    %v1096 = vadd.f32 %v348, %v1095
    %v1097 = vpop.f32.mrb[0].mxu0
    %v1098 = vpop.f32.mrb[0].mxu0
    %v1099 = vadd.f32 %v348, %v1098
    %v1100 = vpop.f32.mrb[0].mxu0
    %1101 = vdwg.mxu0
    %v1102 = vtanh.pop %v967
    %v1103 = vtanh.pop %v969
    %v1104 = vtanh.pop %v1010
    %v1105 = vtanh.pop %v1012
    %v1106 = vtanh.pop %v1053
    %v1107 = vtanh.pop %v1055
    %v1108 = vtanh.pop %v1096
    %v1109 = vtanh.pop %v971
    %v1110 = vtanh.pop %v973
    %v1111 = vtanh.pop %v1014
    %v1112 = vtanh.pop %v1016
    %v1113 = vtanh.pop %v1057
    %v1114 = vtanh.pop %v1059
    %v1115 = vtanh.pop %v1099
    %1116 = vst [vmem:[#allocation8] sm:$0xff] %v1102
    %1117 = vst [vmem:[#allocation8 + $0x8] sm:$0xff] %v1103
    %1118 = vst [vmem:[#allocation8 + $0x10] sm:$0xff] %v1104
    %1119 = vst [vmem:[#allocation8 + $0x18] sm:$0xff] %v1105
    %1120 = vst [vmem:[#allocation8 + $0x20] sm:$0xff] %v1106
    %1121 = vst [vmem:[#allocation8 + $0x28] sm:$0xff] %v1107
    %1122 = vst [vmem:[#allocation8 + $0x30] sm:$0xff] %v1108
    %1123 = vst [vmem:[#allocation8 + $0x38] sm:$0xff] %v1109
    %1124 = vst [vmem:[#allocation8 + $0x40] sm:$0xff] %v1110
    %1125 = vst [vmem:[#allocation8 + $0x48] sm:$0xff] %v1111
    %1126 = vst [vmem:[#allocation8 + $0x50] sm:$0xff] %v1112
    %1127 = vst [vmem:[#allocation8 + $0x58] sm:$0xff] %v1113
    %1128 = vst [vmem:[#allocation8 + $0x60] sm:$0xff] %v1114
    %1129 = vst [vmem:[#allocation8 + $0x68] sm:$0xff] %v1115
    // Predicated region
    $region34: #{tpu_custom_call.1} parent=1 // pred_check
      _
    $region35: #{tpu_custom_call.1} parent=1 // pred_check_branch
      %1131 = sbr.rel (0) target = $region37
    $region36: #{tpu_custom_call.1} parent=1 // pred_region
      %s1133 = ssub.s32 1792, 1792
      %1134 = vsyncadd [#allocation4], %s1133
      %s1135 = sshll.u32 [#allocation8], 4
      %s1136 = int_to_ptr.vmem [resolvable:$true] %s1135
      %1141 = dma.vmem_to_hbm [thread:$0]  %s1136, 1792, %s5, [#allocation4], 896, 896, 56
    $region37: #{tpu_custom_call.1} parent=1 // pred_fallthru
      _
    // Predicated region
    $region38: #{tpu_custom_call.1} parent=1 // pred_check
      _
    $region39: #{tpu_custom_call.1} parent=1 // pred_check_branch
      %1143 = sbr.rel (0) target = $region41
    $region40: #{tpu_custom_call.1} parent=1 // pred_region
      %1144 = dma.done [#allocation4], 1792
    $region41: #{tpu_custom_call.1} parent=1 // pred_fallthru
      _
    %1145 = vsyncpa [#allocation3], 1
    %1146 = vsyncpa [#allocation6], 1
    %1147 = vsyncpa [#allocation4], 1

</llo_original>
